<compile_context>
chip_gen: v7x
topology: tpu7x:2x2x1
jax: 0.10.0
libtpu: 0.0.40
codegen_flags: <defaults>
</compile_context>

<pallas_src>
import jax
import jax.numpy as jnp
from jax.experimental import pallas as pl
from jax.experimental.pallas import tpu as pltpu

_MIB = 1024 * 1024


# ----------------------------------------------------------------------------- #
# Hardware-aware sizing helpers
# ----------------------------------------------------------------------------- #
def _chip_generation():
    """Best-effort TPU generation (4/5/6/7); 0 if unknown."""
    try:
        kind = jax.devices()[0].device_kind.lower().replace(" ", "")
    except Exception:
        return 0
    for gen in (7, 6, 5, 4):
        if f"v{gen}" in kind or f"tpu{gen}" in kind:
            return gen
    return 0


def _vmem_budget():
    """Returns (stream_budget_bytes, vmem_limit_bytes) for the pipeline."""
    gen = _chip_generation()
    if gen in (5, 6):
        # v5e / v6e: 128 MiB physical VMEM; raise the default scoped limit.
        return 40 * _MIB, 56 * _MIB
    if gen >= 7:
        # v7x: 64 MiB physical per TensorCore -- keep the default 32 MiB scope.
        return 14 * _MIB, 32 * _MIB
    try:  # unknown generation: ask the hardware, default conservative (v7x-like).
        if int(pltpu.get_tpu_info().vmem_capacity_bytes) >= 100 * _MIB:
            return 40 * _MIB, 56 * _MIB
    except Exception:
        pass
    return 14 * _MIB, 32 * _MIB


def _divisors_multiple_of(n, m):
    """All divisors of n that are multiples of m, descending."""
    out = set()
    i = 1
    while i * i <= n:
        if n % i == 0:
            for d in (i, n // i):
                if d % m == 0:
                    out.add(d)
        i += 1
    return sorted(out, reverse=True)


def _choose_tiling(B, C, S, feat_itemsize, mask_itemsize, stream_budget,
                   max_tile_s=None):
    """Co-tune (tile_b, tile_s) for the streamed reduction.

    Returns (tile_b, tile_s, s_work) where s_work >= S is the (possibly padded)
    spatial extent the kernel will see.
    """
    # Sublane packing of the channel axis: 8 sublanes for f32, 16 for bf16, 32
    # for int8 -- a (tile_b, C, tile_s) block occupies ceil(C/sub)*sub sublanes.
    sub = max(8, 32 // max(1, feat_itemsize))
    c_pad = -(-C // sub) * sub

    tb_cands = sorted({tb for tb in (B, 64, 32, 16, 8)
                       if tb <= B and tb % 8 == 0 and B % tb == 0},
                      reverse=True) or [B]

    def vmem_bytes(tb, ts):
        lanes = max(ts, 128)                              # lane padding
        last = 2 * tb * c_pad * lanes * feat_itemsize     # double-buffered stream
        mask = 2 * tb * lanes * mask_itemsize             # double-buffered masks
        acc = 2 * tb * lanes * 4                          # two wide f32 partials
        return last + mask + acc

    def pick(ts_cands, s_work):
        best = None
        for tb in tb_cands:                               # descending
            for ts in ts_cands:                           # descending
                if vmem_bytes(tb, ts) <= stream_budget:
                    blk = tb * c_pad * ts * feat_itemsize
                    if best is None or blk > best[0]:
                        best = (blk, tb, ts, s_work)
                    break                                  # largest fit for this tb
        return best

    if S % 128 == 0:
        ts_cands = _divisors_multiple_of(S, 128)
    else:
        ts_cands = [S]                                     # whole spatial axis
    if max_tile_s is not None:
        ts_cands = [t for t in ts_cands if t <= max_tile_s] or [min(ts_cands)]
    best = pick(ts_cands, S)

    if best is None and S % 128 != 0:
        # The whole-S block blows the budget: pad S to a multiple of 128
        # (zero masks contribute nothing to either sum) and tile it.
        s_work = -(-S // 128) * 128
        ts_cands = _divisors_multiple_of(s_work, 128)
        if max_tile_s is not None:
            ts_cands = [t for t in ts_cands if t <= max_tile_s] or [min(ts_cands)]
        best = pick(ts_cands, s_work)

    if best is None:
        # Nothing fits the stream budget even at the minimum tile: take the
        # smallest legal block and rely on the explicit vmem_limit headroom.
        s_work = S if S % 128 == 0 else -(-S // 128) * 128
        best = (0, tb_cands[-1], min(128, s_work), s_work)

    _, tile_b, tile_s, s_work = best
    return tile_b, tile_s, s_work


# ----------------------------------------------------------------------------- #
# Kernel (masked scene reduction; head dot / divide / bias are an XLA epilogue)
# ----------------------------------------------------------------------------- #
def _make_scene_kernel(native_multiply):
    def kernel(last_ref, mask_ref, wsc_ref, acc_out_ref, msum_out_ref,
               acc_ref, msum_ref):
        """One (tile_b, C, tile_s) block of the masked-pool reduction.

        last_ref     : (TB, C, TS)  native dtype (NCHW flattened; S on lanes)
        mask_ref     : (TB, TS)     native dtype
        wsc_ref      : (1, C, 1)    scene half of the Linear weight
        acc_out_ref  : (1, TB, 1)   f32  sum_s (last . w_scene) * mask   (per split)
        msum_out_ref : (1, TB, 1)   f32  sum_s mask                      (per split)
        acc_ref      : (TB, TS) VMEM f32 wide running partial of (last.w)*mask
        msum_ref     : (TB, TS) VMEM f32 wide running partial of mask
        """
        s = pl.program_id(2)

        @pl.when(s == 0)
        def _init():
            acc_ref[...] = jnp.zeros_like(acc_ref)
            msum_ref[...] = jnp.zeros_like(msum_ref)

        last = last_ref[...]                                    # (TB, C, TS)
        if native_multiply:
            # bf16 VPU multiply (v6e/v7x); accumulation stays f32.
            prod = last * wsc_ref[...].astype(last.dtype)
        else:
            prod = last.astype(jnp.float32) * wsc_ref[...].astype(jnp.float32)
        t = jnp.sum(prod.astype(jnp.float32), axis=1)           # (TB, TS) C-reduce
        m = mask_ref[...].astype(jnp.float32)                   # (TB, TS)

        # Wide f32 partials: no per-step cross-lane reduce, no narrow vst.msk.
        acc_ref[...] += t * m
        msum_ref[...] += m

        @pl.when(s == pl.num_programs(2) - 1)
        def _finalize():
            acc_out_ref[...] = jnp.sum(acc_ref[...], axis=-1, keepdims=True)[None]
            msum_out_ref[...] = jnp.sum(msum_ref[...], axis=-1, keepdims=True)[None]

    return kernel


# ----------------------------------------------------------------------------- #
# Wrapper
# ----------------------------------------------------------------------------- #
def simple_linear_forward(head_feat, weight, bias, last_feat=None, masks=None,
                          *, max_tile_s=None):
    """Pallas implementation of SimpleLinear.forward (inference).

    head_feat : (B, C_head)
    weight    : (1, in_channel)  in_channel == C_head (+ C when masks given)
    bias      : (1,)
    last_feat : (B, C, H, W) or None
    masks     : (B, H*W) or None
    returns   : (B, 1) float32
    """
    B, c_head = head_feat.shape
    bias32 = jnp.asarray(bias, jnp.float32).reshape(1, 1)
    head_dot = (head_feat.astype(jnp.float32)
                @ weight[:, :c_head].astype(jnp.float32).T)      # (B, 1)

    if masks is None:
        # Only B*C_head MACs: a pallas_call's fixed overhead dominates and XLA
        # can fuse this with neighbouring ops.
        return head_dot + bias32

    assert last_feat is not None
    Bl, C, H, W = last_feat.shape
    assert Bl == B
    S = H * W
    assert masks.shape == (B, S)
    assert weight.shape == (1, c_head + C)

    last_flat = last_feat.reshape(B, C, S)                       # NCHW -> (B, C, S)
    w_scene = weight[:, c_head:].reshape(1, C, 1)                # (1, C, 1)

    stream_budget, vmem_limit = _vmem_budget()
    tile_b, tile_s, s_work = _choose_tiling(
        B, C, S, last_flat.dtype.itemsize, masks.dtype.itemsize,
        stream_budget, max_tile_s=max_tile_s)

    if s_work != S:
        # Zero-padded spatial tail: zero masks contribute nothing to acc or msum.
        last_flat = jnp.pad(last_flat, ((0, 0), (0, 0), (0, s_work - S)))
        masks_p = jnp.pad(masks, ((0, 0), (0, s_work - S)))
    else:
        masks_p = masks

    b_tiles = B // tile_b
    s_tiles = s_work // tile_s
    # When there is a single batch tile, split the S reduction across a leading
    # "parallel" axis so v7x's second TensorCore gets work (harmless on 1-TC
    # chips: same total steps, two tiny partial outputs combined in XLA).
    n_split = 2 if (b_tiles == 1 and s_tiles >= 2 and s_tiles % 2 == 0) else 1
    s_tiles_local = s_tiles // n_split
    grid = (n_split, b_tiles, s_tiles_local)

    native_multiply = (jnp.dtype(last_flat.dtype) == jnp.dtype(jnp.bfloat16)
                       and _chip_generation() >= 6)

    itemsize = last_flat.dtype.itemsize
    cost = pl.CostEstimate(
        flops=int(2 * B * C * s_work + 3 * B * s_work),
        transcendentals=0,
        bytes_accessed=int(last_flat.size * itemsize
                           + masks_p.size * masks_p.dtype.itemsize
                           + C * weight.dtype.itemsize
                           + 2 * n_split * B * 4),
    )

    grid_spec = pltpu.PrefetchScalarGridSpec(
        num_scalar_prefetch=0,
        grid=grid,
        in_specs=[
            pl.BlockSpec((tile_b, C, tile_s),
                         lambda p, b, s: (b, 0, p * s_tiles_local + s)),   # last_feat
            pl.BlockSpec((tile_b, tile_s),
                         lambda p, b, s: (b, p * s_tiles_local + s)),      # masks
            pl.BlockSpec((1, C, 1), lambda p, b, s: (0, 0, 0)),            # w_scene
        ],
        out_specs=[
            pl.BlockSpec((1, tile_b, 1), lambda p, b, s: (p, b, 0)),       # acc
            pl.BlockSpec((1, tile_b, 1), lambda p, b, s: (p, b, 0)),       # msum
        ],
        scratch_shapes=[pltpu.VMEM((tile_b, tile_s), jnp.float32),
                        pltpu.VMEM((tile_b, tile_s), jnp.float32)],
    )

    acc_out, msum_out = pl.pallas_call(
        _make_scene_kernel(native_multiply),
        out_shape=(jax.ShapeDtypeStruct((n_split, B, 1), jnp.float32),
                   jax.ShapeDtypeStruct((n_split, B, 1), jnp.float32)),
        grid_spec=grid_spec,
        compiler_params=pltpu.CompilerParams(
            dimension_semantics=("parallel", "parallel", "arbitrary"),
            vmem_limit_bytes=vmem_limit),
        cost_estimate=cost,
    )(last_flat, masks_p, w_scene)

    # Tiny XLA epilogue: combine per-split partials, normalize, add head dot+bias.
    acc = jnp.sum(acc_out, axis=0)                               # (B, 1)
    msum = jnp.sum(msum_out, axis=0)                             # (B, 1)
    scene_dot = acc / (msum + 1e-6)
    return head_dot + scene_dot + bias32


# ----------------------------------------------------------------------------- #
# Pure-JAX reference (mirrors the PyTorch forward)
# ----------------------------------------------------------------------------- #
def _reference(head_feat, weight, bias, last_feat=None, masks=None):
    feats = head_feat
    if masks is not None:
        B, C = last_feat.shape[:2]
        scene = jnp.transpose(last_feat.reshape(B, C, -1), (0, 2, 1))   # (B, S, C)
        m = masks / (jnp.sum(masks, axis=-1, keepdims=True) + 1e-6)
        scene = jnp.sum(scene * m[..., None], axis=1)                   # (B, C)
        feats = jnp.concatenate([feats, scene], axis=1)
    return feats @ weight.T + bias                                       # (B, 1)


# ----------------------------------------------------------------------------- #
if __name__ == "__main__":
    key = jax.random.PRNGKey(0)
    B, C, H, W = 2, 4, 16, 16          # last_feat: (B, C, H, W), NCHW
    C_head = 4
    in_channel = C_head + C            # SimpleLinear(in_channel=8)
    S = H * W

    k1, k2, k3, k4, k5, k6, k7 = jax.random.split(key, 7)
    head_feat = jax.random.normal(k1, (B, C_head), dtype=jnp.float32)
    last_feat = jax.random.normal(k2, (B, C, H, W), dtype=jnp.float32)
    masks = jax.random.uniform(k3, (B, S), dtype=jnp.float32)

    # Deterministic nn.Linear(in_channel, 1) init: U(-1/sqrt(fan_in), 1/sqrt(fan_in))
    bound = 1.0 / jnp.sqrt(jnp.float32(in_channel))
    weight = jax.random.uniform(k4, (1, in_channel), minval=-bound, maxval=bound,
                                dtype=jnp.float32)
    bias = jax.random.uniform(k5, (1,), minval=-bound, maxval=bound,
                              dtype=jnp.float32)

    # TODO(synk): training-mode dropout (stochastic masking via pltpu.prng_*)
    # is not implemented; inference dropout is the identity.

    ref = _reference(head_feat, weight, bias, last_feat=last_feat, masks=masks)

    # 1) Masked path, default (largest-fit) tiles: single S step.
    out = simple_linear_forward(head_feat, weight, bias,
                                last_feat=last_feat, masks=masks)
    out = jax.block_until_ready(out)
    assert out.shape == (B, 1)
    assert jnp.allclose(out, ref, atol=1e-5, rtol=1e-5), (out, ref)

    # 2) Forced multi-step spatial grid: exercises init/accumulate/finalize and
    #    the size-2 parallel S-split (B_tiles == 1, S_tiles == 2).
    out2 = simple_linear_forward(head_feat, weight, bias,
                                 last_feat=last_feat, masks=masks, max_tile_s=128)
    out2 = jax.block_until_ready(out2)
    assert jnp.allclose(out2, ref, atol=1e-5, rtol=1e-5), (out2, ref)

    # 3) bf16 features: native-dtype DMA (and bf16 multiply on v6e/v7x),
    #    f32 accumulation.
    hf_bf = head_feat.astype(jnp.bfloat16)
    lf_bf = last_feat.astype(jnp.bfloat16)
    out_bf = simple_linear_forward(hf_bf, weight, bias,
                                   last_feat=lf_bf, masks=masks, max_tile_s=128)
    out_bf = jax.block_until_ready(out_bf)
    ref_bf = _reference(hf_bf.astype(jnp.float32), weight, bias,
                        last_feat=lf_bf.astype(jnp.float32), masks=masks)
    assert jnp.allclose(out_bf, ref_bf, atol=1e-2, rtol=1e-2), (out_bf, ref_bf)

    # 4) Non-128-aligned spatial size (7x7 -> S=49): whole-S block path.
    last_small = jax.random.normal(k6, (B, C, 7, 7), dtype=jnp.float32)
    masks_small = jax.random.uniform(k7, (B, 49), dtype=jnp.float32)
    ref_small = _reference(head_feat, weight, bias,
                           last_feat=last_small, masks=masks_small)
    out_small = simple_linear_forward(head_feat, weight, bias,
                                      last_feat=last_small, masks=masks_small)
    out_small = jax.block_until_ready(out_small)
    assert jnp.allclose(out_small, ref_small, atol=1e-5, rtol=1e-5)

    # 5) masks=None path (plain XLA; only a tiny GEMV).
    w_small = weight[:, :C_head]
    out_nm = jax.block_until_ready(simple_linear_forward(head_feat, w_small, bias))
    ref_nm = _reference(head_feat, w_small, bias)
    assert jnp.allclose(out_nm, ref_nm, atol=1e-5, rtol=1e-5)

    print("KERNEL_OK")
</pallas_src>

<mosaic_0001>
module attributes {stable_mosaic.version = 11 : i64} {
  func.func @kernel(%arg0: i32, %arg1: i32, %arg2: i32, %arg3: memref<2x4x256xf32, #tpu.memory_space<vmem>>, %arg4: memref<2x256xf32, #tpu.memory_space<vmem>>, %arg5: memref<1x4x1xf32, #tpu.memory_space<vmem>>, %arg6: memref<1x2x1xf32, #tpu.memory_space<vmem>>, %arg7: memref<1x2x1xf32, #tpu.memory_space<vmem>>, %arg8: memref<2x256xf32, #tpu.memory_space<vmem>>, %arg9: memref<2x256xf32, #tpu.memory_space<vmem>>) attributes {dimension_semantics = [#tpu.dimension_semantics<parallel>, #tpu.dimension_semantics<parallel>, #tpu.dimension_semantics<arbitrary>], iteration_bounds = array<i64: 1, 1, 1>, scalar_prefetch = 0 : i64, scratch_operands = 2 : i64, tpu.core_type = #tpu.core_type<tc>, window_params = [{transform_indices = @transform_0, window_bounds = array<i64: 2, 4, 256>}, {transform_indices = @transform_1, window_bounds = array<i64: 2, 256>}, {pipeline_mode = #tpu.pipeline_mode<synchronous>, transform_indices = @transform_2, window_bounds = array<i64: 1, 4, 1>}, {transform_indices = @transform_3, window_bounds = array<i64: 1, 2, 1>}, {transform_indices = @transform_4, window_bounds = array<i64: 1, 2, 1>}]} {
    %c0_i32 = arith.constant 0 : i32
    %0 = arith.cmpi eq, %arg2, %c0_i32 : i32
    %1 = arith.extui %0 : i1 to i32
    %c0_i32_0 = arith.constant 0 : i32
    %2 = arith.cmpi ne, %1, %c0_i32_0 : i32
    scf.if %2 {
      %cst_18 = arith.constant 0.000000e+00 : f32
      %19 = vector.broadcast %cst_18 : f32 to vector<2x256xf32>
      %c0_19 = arith.constant 0 : index
      %c0_20 = arith.constant 0 : index
      %20 = vector.load %arg8[%c0_19, %c0_20] : memref<2x256xf32, #tpu.memory_space<vmem>>, vector<2x256xf32>
      tpu.vector_store %arg8[%c0_19, %c0_20], %19 {strides = array<i32>} : memref<2x256xf32, #tpu.memory_space<vmem>>, vector<2x256xf32>,
      %cst_21 = arith.constant 0.000000e+00 : f32
      %21 = vector.broadcast %cst_21 : f32 to vector<2x256xf32>
      %c0_22 = arith.constant 0 : index
      %c0_23 = arith.constant 0 : index
      %22 = vector.load %arg9[%c0_22, %c0_23] : memref<2x256xf32, #tpu.memory_space<vmem>>, vector<2x256xf32>
      tpu.vector_store %arg9[%c0_22, %c0_23], %21 {strides = array<i32>} : memref<2x256xf32, #tpu.memory_space<vmem>>, vector<2x256xf32>,
    } else {
    }
    %c0 = arith.constant 0 : index
    %c0_1 = arith.constant 0 : index
    %c0_2 = arith.constant 0 : index
    %3 = vector.load %arg3[%c0, %c0_1, %c0_2] : memref<2x4x256xf32, #tpu.memory_space<vmem>>, vector<2x4x256xf32>
    %c0_3 = arith.constant 0 : index
    %c0_4 = arith.constant 0 : index
    %c0_5 = arith.constant 0 : index
    %4 = vector.load %arg5[%c0_3, %c0_4, %c0_5] : memref<1x4x1xf32, #tpu.memory_space<vmem>>, vector<1x4x1xf32>
    %5 = vector.broadcast %4 : vector<1x4x1xf32> to vector<2x4x256xf32>
    %6 = arith.mulf %3, %5 : vector<2x4x256xf32>
    %cst = arith.constant dense<0.000000e+00> : vector<2x256xf32>
    %7 = vector.multi_reduction <add>, %6, %cst [1] : vector<2x4x256xf32> to vector<2x256xf32>
    %c0_6 = arith.constant 0 : index
    %c0_7 = arith.constant 0 : index
    %8 = vector.load %arg4[%c0_6, %c0_7] : memref<2x256xf32, #tpu.memory_space<vmem>>, vector<2x256xf32>
    %c0_8 = arith.constant 0 : index
    %c0_9 = arith.constant 0 : index
    %9 = vector.load %arg8[%c0_8, %c0_9] : memref<2x256xf32, #tpu.memory_space<vmem>>, vector<2x256xf32>
    %10 = arith.mulf %7, %8 : vector<2x256xf32>
    %11 = arith.addf %9, %10 : vector<2x256xf32>
    %c0_10 = arith.constant 0 : index
    %c0_11 = arith.constant 0 : index
    %12 = vector.load %arg8[%c0_10, %c0_11] : memref<2x256xf32, #tpu.memory_space<vmem>>, vector<2x256xf32>
    tpu.vector_store %arg8[%c0_10, %c0_11], %11 {strides = array<i32>} : memref<2x256xf32, #tpu.memory_space<vmem>>, vector<2x256xf32>,
    %c0_12 = arith.constant 0 : index
    %c0_13 = arith.constant 0 : index
    %13 = vector.load %arg9[%c0_12, %c0_13] : memref<2x256xf32, #tpu.memory_space<vmem>>, vector<2x256xf32>
    %14 = arith.addf %13, %8 : vector<2x256xf32>
    %c0_14 = arith.constant 0 : index
    %c0_15 = arith.constant 0 : index
    %15 = vector.load %arg9[%c0_14, %c0_15] : memref<2x256xf32, #tpu.memory_space<vmem>>, vector<2x256xf32>
    tpu.vector_store %arg9[%c0_14, %c0_15], %14 {strides = array<i32>} : memref<2x256xf32, #tpu.memory_space<vmem>>, vector<2x256xf32>,
    %c0_i32_16 = arith.constant 0 : i32
    %16 = arith.cmpi eq, %arg2, %c0_i32_16 : i32
    %17 = arith.extui %16 : i1 to i32
    %c0_i32_17 = arith.constant 0 : i32
    %18 = arith.cmpi ne, %17, %c0_i32_17 : i32
    scf.if %18 {
      %c0_18 = arith.constant 0 : index
      %c0_19 = arith.constant 0 : index
      %19 = vector.load %arg8[%c0_18, %c0_19] : memref<2x256xf32, #tpu.memory_space<vmem>>, vector<2x256xf32>
      %cst_20 = arith.constant dense<0.000000e+00> : vector<2xf32>
      %20 = vector.multi_reduction <add>, %19, %cst_20 [1] : vector<2x256xf32> to vector<2xf32>
      %21 = vector.shape_cast %20 : vector<2xf32> to vector<2x1xf32>
      %22 = vector.shape_cast %21 : vector<2x1xf32> to vector<1x2x1xf32>
      %c0_21 = arith.constant 0 : index
      %c0_22 = arith.constant 0 : index
      %c0_23 = arith.constant 0 : index
      %23 = vector.load %arg6[%c0_21, %c0_22, %c0_23] : memref<1x2x1xf32, #tpu.memory_space<vmem>>, vector<1x2x1xf32>
      tpu.vector_store %arg6[%c0_21, %c0_22, %c0_23], %22 {strides = array<i32>} : memref<1x2x1xf32, #tpu.memory_space<vmem>>, vector<1x2x1xf32>,
      %c0_24 = arith.constant 0 : index
      %c0_25 = arith.constant 0 : index
      %24 = vector.load %arg9[%c0_24, %c0_25] : memref<2x256xf32, #tpu.memory_space<vmem>>, vector<2x256xf32>
      %cst_26 = arith.constant dense<0.000000e+00> : vector<2xf32>
      %25 = vector.multi_reduction <add>, %24, %cst_26 [1] : vector<2x256xf32> to vector<2xf32>
      %26 = vector.shape_cast %25 : vector<2xf32> to vector<2x1xf32>
      %27 = vector.shape_cast %26 : vector<2x1xf32> to vector<1x2x1xf32>
      %c0_27 = arith.constant 0 : index
      %c0_28 = arith.constant 0 : index
      %c0_29 = arith.constant 0 : index
      %28 = vector.load %arg7[%c0_27, %c0_28, %c0_29] : memref<1x2x1xf32, #tpu.memory_space<vmem>>, vector<1x2x1xf32>
      tpu.vector_store %arg7[%c0_27, %c0_28, %c0_29], %27 {strides = array<i32>} : memref<1x2x1xf32, #tpu.memory_space<vmem>>, vector<1x2x1xf32>,
    } else {
    }
    return
  }
  func.func @transform_0(%arg0: i32, %arg1: i32, %arg2: i32) -> (i32, i32, i32) {
    %c1_i32 = arith.constant 1 : i32
    %0 = arith.muli %arg0, %c1_i32 : i32
    %1 = arith.addi %0, %arg2 : i32
    %c0_i32 = arith.constant 0 : i32
    %c0_i32_0 = arith.constant 0 : i32
    return %arg1, %c0_i32, %1 : i32, i32, i32
  }
  func.func @transform_1(%arg0: i32, %arg1: i32, %arg2: i32) -> (i32, i32) {
    %c1_i32 = arith.constant 1 : i32
    %0 = arith.muli %arg0, %c1_i32 : i32
    %1 = arith.addi %0, %arg2 : i32
    %c0_i32 = arith.constant 0 : i32
    return %arg1, %1 : i32, i32
  }
  func.func @transform_2(%arg0: i32, %arg1: i32, %arg2: i32) -> (i32, i32, i32) {
    %c0_i32 = arith.constant 0 : i32
    %c0_i32_0 = arith.constant 0 : i32
    %c0_i32_1 = arith.constant 0 : i32
    %c0_i32_2 = arith.constant 0 : i32
    return %c0_i32, %c0_i32_0, %c0_i32_1 : i32, i32, i32
  }
  func.func @transform_3(%arg0: i32, %arg1: i32, %arg2: i32) -> (i32, i32, i32) {
    %c0_i32 = arith.constant 0 : i32
    %c0_i32_0 = arith.constant 0 : i32
    return %arg0, %arg1, %c0_i32 : i32, i32, i32
  }
  func.func @transform_4(%arg0: i32, %arg1: i32, %arg2: i32) -> (i32, i32, i32) {
    %c0_i32 = arith.constant 0 : i32
    %c0_i32_0 = arith.constant 0 : i32
    return %arg0, %arg1, %c0_i32 : i32, i32, i32
  }
}

</mosaic_0001>

<llo_original>
// kernel: tpu_custom_call.1
$region0: #{tpu_custom_call.1}
  #allocation0 [shape = 'u32[]', space=smem, size = 0x4, offset = 0x4, fixed_abs, tag = 'smem constant byte address 0x4 - core index']
  #allocation1 [shape = 'u32[144,128]{1,0:T(1,128)}', space=vmem, size = 0x12000, scoped, tag = 'internal scratch']
  #allocation2 [shape = 'f32[2,256]{1,0:T(2,128)}', space=vmem, size = 0x800, scoped, tag = 'scratch operand']
  #allocation3 [shape = 'f32[2,256]{1,0:T(2,128)}', space=vmem, size = 0x800, scoped, tag = 'scratch operand']
  %s0 = inlined_call_operand.hbm [shape: f32[2,4,256], index: 0, kind: input, shape index: {}]
  %s1 = inlined_call_operand.vmem [shape: f32[2,256], index: 1, kind: input, shape index: {}]
  %s2 = inlined_call_operand.vmem [shape: f32[1,4,1], index: 2, kind: input, shape index: {}]
  %s3 = inlined_call_operand.vmem [shape: f32[1,2,1], index: 3, kind: output, shape index: {0}]
  %s4 = inlined_call_operand.vmem [shape: f32[1,2,1], index: 4, kind: output, shape index: {1}]
  %5 = xla_tuple %s3, %s4
  %s6 = sld [smem:[#allocation0]]
  $region42: #{tpu_custom_call.1} parent=0
    _
  %s8 = ssub.s32 1, %s6
  %s9 = scalar_select 0, %s8, %s6
  $region1: #{tpu_custom_call.1} parent=0
    #allocation4 [shape = 'u8[8192]{0}', space=vmem, size = 0x2000, scoped, tag = 'input window, operand 0, single buffered']
    #allocation5 [shape = 's32[1]{0}', space=sflag, size = 0x4, scoped, tag = 'scoped memory for tpu_custom_call.1']
    %10 = vsyncpa [#allocation5], 0
    // Predicated region
    $region2: #{tpu_custom_call.1} parent=1 // pred_check
      _
    $region3: #{tpu_custom_call.1} parent=1 // pred_check_branch
      %12 = sbr.rel (0) target = $region5
    $region4: #{tpu_custom_call.1} parent=1 // pred_region
      %s13 = sadd.s32 0, 0
      %s14 = smul.u32 2, %s13
      %s16 = ssub.s32 256, 256
      %17 = vsyncadd [#allocation5], %s16
      %s18 = smul.addr %s14, 64
      %s19 = scalar_lea.hbm %s0, %s18
      %s20 = sshll.u32 [#allocation4], 4
      %s21 = int_to_ptr.vmem [resolvable:$true] %s20
      %26 = dma.hbm_to_vmem [thread:$0]  %s19, 256, %s21, [#allocation5], 128, 128, 8
    $region5: #{tpu_custom_call.1} parent=1 // pred_fallthru
      _
    // Predicated region
    $region6: #{tpu_custom_call.1} parent=1 // pred_check
      _
    $region7: #{tpu_custom_call.1} parent=1 // pred_check_branch
      %28 = sbr.rel (0) target = $region9
    $region8: #{tpu_custom_call.1} parent=1 // pred_region
      %s29 = sadd.s32 0, 0
      %s30 = smul.u32 2, %s29
      %p31 = scmp.lt.s32.totalorder %s30, 1
      %s32 = scalar_select %p31, %s30, 1
      %s33 = smul.addr %s32, 2
      %s34 = scalar_lea.vmem %s1, %s33
      %s35 = sadd.s32 0, 0
      %s36 = smul.u32 2, %s35
    $region9: #{tpu_custom_call.1} parent=1 // pred_fallthru
      _
    // Predicated region
    $region10: #{tpu_custom_call.1} parent=1 // pred_check
      _
    $region11: #{tpu_custom_call.1} parent=1 // pred_check_branch
      %38 = sbr.rel (0) target = $region13
    $region12: #{tpu_custom_call.1} parent=1 // pred_region
      _
    $region13: #{tpu_custom_call.1} parent=1 // pred_fallthru
      _
    // Predicated region
    $region14: #{tpu_custom_call.1} parent=1 // pred_check
      _
    $region15: #{tpu_custom_call.1} parent=1 // pred_check_branch
      %40 = sbr.rel (0) target = $region17
    $region16: #{tpu_custom_call.1} parent=1 // pred_region
      %41 = dma.done [#allocation5], 256
    $region17: #{tpu_custom_call.1} parent=1 // pred_fallthru
      _
    %s42 = sadd.s32 0, 0
    %s43 = smul.u32 2, %s42
    %p44 = scmp.lt.s32.totalorder %s43, 1
    %s45 = scalar_select %p44, %s43, 1
    %s46 = smul.addr %s45, 2
    %s47 = scalar_lea.vmem %s1, %s46
    %s48 = sadd.s32 0, 0
    %s49 = smul.u32 2, %s48
    %s50 = sadd.s32 0, 0
    %s51 = smul.u32 2, %s50
    %p52 = scmp.lt.s32.totalorder %s51, 1
    %s53 = scalar_select %p52, %s51, 1
    %s54 = smul.addr %s53, 2
    %s55 = scalar_lea.vmem %s1, %s54
    %s56 = sadd.s32 0, 0
    %s57 = smul.u32 2, %s56
    %p58 = scmp.eq.s32.totalorder 0, 0
    // Predicated region
    $region18: #{tpu_custom_call.1} parent=1 // pred_check
      %p59 = pneg %p58
    $region19: #{tpu_custom_call.1} parent=1 // pred_check_branch
      %61 = sbr.rel (%p59) target = $region21
    $region20: #{tpu_custom_call.1} parent=1 // pred_region
      %62 = vst [vmem:[#allocation2] sm:$0xf] 0.0
      %63 = vst [vmem:[#allocation3] sm:$0xf] 0.0
    $region21: #{tpu_custom_call.1} parent=1 // pred_fallthru
      _
    %v64 = vld [vmem:[#allocation4] sm:$0xff]
    %v65 = vld [vmem:[#allocation4 + $0x8] sm:$0xff]
    %v66 = vld [vmem:[%s2] sm:$0xf]
    %68 = vset.pattern.permute.xlu0 0
    %69 = vperm.xlu0 %68, %v66
    %v70 = vpop.permute.xlu0 %69
    %v72 = vunpack.c.l.s4 839922192
    %v73 = vunpack.c.0.s8 %v72
    %v74 = vlaneseq
    %v75 = vshrl.u32 %v74, 7
    %v76 = vsub.s32 %v73, %v75
    %v77 = vrot.slane %v70, %v76
    %v79 = vmul.f32 %v64, %v77
    %v80 = vmul.f32 %v65, %v77
    %v83 = vcombine.high %v79, %v79
    %v84 = vcombine.high %v80, %v80
    %vm87 = vcmask 1043456
    %v88 = vsel %vm87, %v79, 0.0
    %v89 = vrot.slane %v88, 4
    %v90 = vadd.f32 %v88, %v89
    %v91 = vrot.slane %v90, 2
    %v92 = vadd.f32 %v90, %v91
    %v93 = vrot.slane %v92, 1
    %v94 = vadd.f32 %v92, %v93
    %v95 = vsel %vm87, %v83, 0.0
    %v96 = vrot.slane %v95, 4
    %v97 = vadd.f32 %v95, %v96
    %v98 = vrot.slane %v97, 2
    %v99 = vadd.f32 %v97, %v98
    %v100 = vrot.slane %v99, 1
    %v101 = vadd.f32 %v99, %v100
    %v102 = vsel %vm87, %v80, 0.0
    %v103 = vrot.slane %v102, 4
    %v104 = vadd.f32 %v102, %v103
    %v105 = vrot.slane %v104, 2
    %v106 = vadd.f32 %v104, %v105
    %v107 = vrot.slane %v106, 1
    %v108 = vadd.f32 %v106, %v107
    %v109 = vsel %vm87, %v84, 0.0
    %v110 = vrot.slane %v109, 4
    %v111 = vadd.f32 %v109, %v110
    %v112 = vrot.slane %v111, 2
    %v113 = vadd.f32 %v111, %v112
    %v114 = vrot.slane %v113, 1
    %v115 = vadd.f32 %v113, %v114
    %v116 = vld [vmem:[%s55] sm:$0xf]
    %v117 = vld [vmem:[#allocation2] sm:$0xf]
    %v120 = vunpack.c.l.s4 1983009808
    %v121 = vunpack.c.0.s8 %v120
    %v122 = vlaneseq
    %v123 = vshrl.u32 %v122, 7
    %v124 = vsub.s32 %v121, %v123
    %v125 = vrot.slane %v116, %v124
    %v126 = vcombine.high %v125, %v125
    %v127 = vrot.slane %v125, 1
    %v128 = vrot.slane %v126, 1
    %v133 = vmul.f32 %v94, %v125
    %v134 = vmul.f32 %v101, %v126
    %v135 = vmul.f32 %v108, %v127
    %v136 = vmul.f32 %v115, %v128
    %v141 = vcombine.low %v133, %v134
    %v143 = vunpack.c.l.s4 1983009808
    %v144 = vunpack.c.0.s8 %v143
    %v145 = vlaneseq
    %v146 = vshrl.u32 %v145, 7
    %v147 = vsub.s32 %v144, %v146
    %v148 = vrot.slane %v141, %v147
    %v149 = vcombine.low %v135, %v136
    %v151 = vunpack.c.l.s4 1983009808
    %v152 = vunpack.c.0.s8 %v151
    %v153 = vlaneseq
    %v154 = vshrl.u32 %v153, 7
    %v155 = vsub.s32 %v152, %v154
    %v156 = vrot.slane %v149, %v155
    %vm157 = vcmask 1044484
    %v158 = vsel %vm157, %v148, %v148
    %vm159 = vcmask 1046534
    %v160 = vsel %vm159, %v148, %v158
    %v161 = vrot.slane %v156, 7
    %vm162 = vcmask 1041409
    %v163 = vsel %vm162, %v161, %v160
    %vm164 = vcmask 1043459
    %v165 = vsel %vm164, %v161, %v163
    %vm166 = vcmask 1045509
    %v167 = vsel %vm166, %v161, %v165
    %vm168 = vcmask 1047559
    %v169 = vsel %vm168, %v161, %v167
    %v171 = vadd.f32 %v117, %v169
    %172 = vst [vmem:[#allocation2] sm:$0xf] %v171
    %v173 = vld [vmem:[#allocation3] sm:$0xf]
    %v174 = vadd.f32 %v173, %v116
    %175 = vst [vmem:[#allocation3] sm:$0xf] %v174
    // Predicated region
    $region22: #{tpu_custom_call.1} parent=1 // pred_check
      %p176 = pneg %p58
    $region23: #{tpu_custom_call.1} parent=1 // pred_check_branch
      %178 = sbr.rel (%p176) target = $region25
    $region24: #{tpu_custom_call.1} parent=1 // pred_region
      %v179 = vld [vmem:[#allocation2] sm:$0xf]
      %v182 = vunpack.c.l.s4 1983009808
      %v183 = vunpack.c.0.s8 %v182
      %v184 = vlaneseq
      %v185 = vshrl.u32 %v184, 7
      %v186 = vsub.s32 %v183, %v185
      %v187 = vrot.slane %v179, %v186
      %v188 = vcombine.high %v187, %v187
      %vm191 = vcmask 1041408
      %v192 = vsel %vm191, %v187, 0.0
      %v193 = vsel %vm191, %v188, 0.0
      %v194 = vadd.f32 %v192, %v193
      %195 = vadd.xlane.f32.xlu0 %v194
      %v196 = vpop.xlane.xlu0 %195
      %vm197 = vcmask 1024
      %198 = vst.msk [vmem:[%s3] sm:$0x3] %vm197, %v196
      %v199 = vld [vmem:[#allocation3] sm:$0xf]
      %v202 = vunpack.c.l.s4 1983009808
      %v203 = vunpack.c.0.s8 %v202
      %v204 = vlaneseq
      %v205 = vshrl.u32 %v204, 7
      %v206 = vsub.s32 %v203, %v205
      %v207 = vrot.slane %v199, %v206
      %v208 = vcombine.high %v207, %v207
      %v211 = vsel %vm191, %v207, 0.0
      %v212 = vsel %vm191, %v208, 0.0
      %v213 = vadd.f32 %v211, %v212
      %214 = vadd.xlane.f32.xlu0 %v213
      %v215 = vpop.xlane.xlu0 %214
      %216 = vst.msk [vmem:[%s4] sm:$0x3] %vm197, %v215
    $region25: #{tpu_custom_call.1} parent=1 // pred_fallthru
      _
    // Predicated region
    $region26: #{tpu_custom_call.1} parent=1 // pred_check
      _
    $region27: #{tpu_custom_call.1} parent=1 // pred_check_branch
      %218 = sbr.rel (0) target = $region29
    $region28: #{tpu_custom_call.1} parent=1 // pred_region
      _
    $region29: #{tpu_custom_call.1} parent=1 // pred_fallthru
      _
    // Predicated region
    $region30: #{tpu_custom_call.1} parent=1 // pred_check
      _
    $region31: #{tpu_custom_call.1} parent=1 // pred_check_branch
      %220 = sbr.rel (0) target = $region33
    $region32: #{tpu_custom_call.1} parent=1 // pred_region
      _
    $region33: #{tpu_custom_call.1} parent=1 // pred_fallthru
      _
    // Predicated region
    $region34: #{tpu_custom_call.1} parent=1 // pred_check
      _
    $region35: #{tpu_custom_call.1} parent=1 // pred_check_branch
      %222 = sbr.rel (0) target = $region37
    $region36: #{tpu_custom_call.1} parent=1 // pred_region
      _
    $region37: #{tpu_custom_call.1} parent=1 // pred_fallthru
      _
    // Predicated region
    $region38: #{tpu_custom_call.1} parent=1 // pred_check
      _
    $region39: #{tpu_custom_call.1} parent=1 // pred_check_branch
      %224 = sbr.rel (0) target = $region41
    $region40: #{tpu_custom_call.1} parent=1 // pred_region
      _
    $region41: #{tpu_custom_call.1} parent=1 // pred_fallthru
      _
    %225 = vsyncpa [#allocation5], 1

</llo_original>
